<compile_context>
chip_gen: v7x
topology: tpu7x:2x2x1
jax: 0.10.0
libtpu: 0.0.40
codegen_flags: <defaults>
</compile_context>

<pallas_src>
import functools

import jax
import jax.numpy as jnp
from jax.experimental import pallas as pl
from jax.experimental.pallas import tpu as pltpu


def _etp_kernel(f1_ref, f2_ref, c_ref, o_ref, *, n1):
    # f1_ref: (n1,  tz)   f2_ref: (n2p, tz)   c_ref: (K, n1*n2p)   o_ref: (K, tz)
    f1 = f1_ref[...].astype(jnp.float32)
    f2 = f2_ref[...].astype(jnp.float32)
    # pair[i*n2p + j, z] = f1[i, z] * f2[j, z]
    #   - f1[i:i+1, :] * f2 is a sublane broadcast + VPU multiply
    #   - pieces are (n2p, tz) with n2p a multiple of 8 => aligned sublane concat
    parts = [f1[i:i + 1, :] * f2 for i in range(n1)]
    pair = jnp.concatenate(parts, axis=0) if n1 > 1 else parts[0]   # (n1*n2p, tz)
    # single MXU contraction; result is lane-dense along z
    out = jnp.dot(c_ref[...], pair, preferred_element_type=jnp.float32)  # (K, tz)
    o_ref[...] = out.astype(o_ref.dtype)


def _pick_row_tile(z, tz):
    """Tile along z (the lane dim): a multiple of 128, or the whole axis.

    For large z the tile is capped so the grid has at least 2 steps, letting
    dimension_semantics=("parallel",) shard z across both v7x TensorCores.
    """
    tz = max(128, (tz // 128) * 128)          # sanitize to a 128-multiple
    if z > 256:
        half = ((-(-z // 2)) + 127) // 128 * 128   # ~z/2 rounded up to 128
        return min(tz, half)
    if z > tz:
        return tz
    return z                                   # single full block (block == full dim)


def elementwise_tensor_product(features_1, features_2, mixing_matrix, *, tz=4096):
    """Equivalent of ElementwiseTensorProduct.forward.

    features_1: [..., n_1], features_2: [..., n_2] (same leading dims)
    mixing_matrix: [K, n_1, n_2]  (the module's registered buffer layout)
    returns: [..., K]
    """
    *size_1, n1 = features_1.shape
    *size_2, n2 = features_2.shape
    assert size_1 == size_2, "leading dims of features_1/features_2 must match"
    z = 1
    for s in size_1:
        z *= s
    k_out = mixing_matrix.shape[0]
    out_dtype = jnp.result_type(features_1.dtype, features_2.dtype)

    # Feature-major layout: z goes to lanes (contiguous, lane-dense DMA rows).
    f1_t = jnp.swapaxes(features_1.reshape(z, n1), 0, 1)          # (n1, z)
    f2_t = jnp.swapaxes(features_2.reshape(z, n2), 0, 1)          # (n2, z)

    # Pad the j (features_2) axis to a multiple of 8 sublanes so the in-kernel
    # concat of the n1 outer-product pieces lands on tile-aligned offsets.
    n2p = ((n2 + 7) // 8) * 8
    if n2p != n2:
        f2_t = jnp.concatenate(
            [f2_t, jnp.zeros((n2p - n2, z), f2_t.dtype)], axis=0)  # (n2p, z)

    # C[k, i, j] -> C_flat[k, i*n2p + j]; padded j columns are zero.
    c_pad = jnp.zeros((k_out, n1, n2p), jnp.float32)
    c_pad = c_pad.at[:, :, :n2].set(mixing_matrix.astype(jnp.float32))
    c_flat = c_pad.reshape(k_out, n1 * n2p)                        # (K, n1*n2p)

    tz_eff = _pick_row_tile(z, tz)
    grid = pl.cdiv(z, tz_eff)

    kernel = functools.partial(_etp_kernel, n1=n1)

    out_t = pl.pallas_call(
        kernel,
        out_shape=jax.ShapeDtypeStruct((k_out, z), out_dtype),
        grid_spec=pltpu.PrefetchScalarGridSpec(
            num_scalar_prefetch=0,
            grid=(grid,),
            in_specs=[
                pl.BlockSpec((n1, tz_eff), lambda zi: (0, zi)),
                pl.BlockSpec((n2p, tz_eff), lambda zi: (0, zi)),
                # constant block index => stays resident in VMEM across steps
                pl.BlockSpec((k_out, n1 * n2p), lambda zi: (0, 0)),
            ],
            out_specs=pl.BlockSpec((k_out, tz_eff), lambda zi: (0, zi)),
        ),
        compiler_params=pltpu.CompilerParams(
            dimension_semantics=("parallel",)),
    )(f1_t, f2_t, c_flat)

    # Cheap channel-major -> channel-last transpose done in XLA (outside kernel).
    return jnp.swapaxes(out_t, 0, 1).reshape(*size_1, k_out)


def _rs_dim(rs_list):
    # Rs = [(multiplicity, l)] -> dim = sum mult * (2l + 1)
    return sum(mult * (2 * l + 1) for mult, l in rs_list)


if __name__ == "__main__":
    # Rs from the module docstring: [(2, 0), (1, 1)] x [(1, 1), (2, 0)]
    # -> output Rs [(1, 1), (1, 0), (1, 1)], i.e. K = 7 output channels.
    Rs_1 = [(2, 0), (1, 1)]       # dim 5
    Rs_2 = [(1, 1), (2, 0)]       # dim 5
    n1 = _rs_dim(Rs_1)
    n2 = _rs_dim(Rs_2)
    k_out = 7

    key = jax.random.PRNGKey(0)
    k_mix, k_f1, k_f2, k_g1, k_g2, k_h1, k_h2 = jax.random.split(key, 7)

    # TODO(synk): real e3nn builds mixing_matrix via rs.elementwise_tensor_product
    # (Wigner 3j coefficients); here it is a deterministic synthetic buffer of
    # the same shape [K, n1, n2] -- the forward einsum semantics are identical.
    mixing_matrix = jax.random.normal(k_mix, (k_out, n1, n2), dtype=jnp.float32)

    def ref_fn(a, b, shp):
        return jnp.einsum("kij,zi,zj->zk", mixing_matrix,
                          a.reshape(-1, n1), b.reshape(-1, n2)).reshape(*shp, k_out)

    # 1) small batch: leading dims (2, 8), channels-last features
    f1 = jax.random.normal(k_f1, (2, 8, n1), dtype=jnp.float32)
    f2 = jax.random.normal(k_f2, (2, 8, n2), dtype=jnp.float32)
    out = jax.block_until_ready(elementwise_tensor_product(f1, f2, mixing_matrix))
    ref = ref_fn(f1, f2, (2, 8))
    assert out.shape == (2, 8, k_out), out.shape
    assert jnp.allclose(out, ref, atol=1e-4, rtol=1e-4), float(
        jnp.max(jnp.abs(out - ref)))

    # 2) z not divisible by the lane tile (grid=2 + masked partial last block)
    g1 = jax.random.normal(k_g1, (3, 67, n1), dtype=jnp.float32)
    g2 = jax.random.normal(k_g2, (3, 67, n2), dtype=jnp.float32)
    out2 = jax.block_until_ready(
        elementwise_tensor_product(g1, g2, mixing_matrix, tz=128))
    ref2 = ref_fn(g1, g2, (3, 67))
    assert out2.shape == (3, 67, k_out), out2.shape
    assert jnp.allclose(out2, ref2, atol=1e-4, rtol=1e-4), float(
        jnp.max(jnp.abs(out2 - ref2)))

    # 3) larger z: exercises the automatic >=2-step split (megacore path)
    h1 = jax.random.normal(k_h1, (4, 100, n1), dtype=jnp.float32)
    h2 = jax.random.normal(k_h2, (4, 100, n2), dtype=jnp.float32)
    out3 = jax.block_until_ready(elementwise_tensor_product(h1, h2, mixing_matrix))
    ref3 = ref_fn(h1, h2, (4, 100))
    assert out3.shape == (4, 100, k_out), out3.shape
    assert jnp.allclose(out3, ref3, atol=1e-4, rtol=1e-4), float(
        jnp.max(jnp.abs(out3 - ref3)))

    print("KERNEL_OK")
</pallas_src>

<mosaic_0001>
module attributes {stable_mosaic.version = 11 : i64} {
  func.func @_etp_kernel(%arg0: i32, %arg1: memref<5x16xf32, #tpu.memory_space<vmem>>, %arg2: memref<8x16xf32, #tpu.memory_space<vmem>>, %arg3: memref<7x40xf32, #tpu.memory_space<vmem>>, %arg4: memref<7x16xf32, #tpu.memory_space<vmem>>) attributes {dimension_semantics = [#tpu.dimension_semantics<parallel>], iteration_bounds = array<i64: 1>, scalar_prefetch = 0 : i64, scratch_operands = 0 : i64, tpu.core_type = #tpu.core_type<tc>, window_params = [{transform_indices = @transform_0, window_bounds = array<i64: 5, 16>}, {transform_indices = @transform_1, window_bounds = array<i64: 8, 16>}, {pipeline_mode = #tpu.pipeline_mode<synchronous>, transform_indices = @transform_2, window_bounds = array<i64: 7, 40>}, {transform_indices = @transform_3, window_bounds = array<i64: 7, 16>}]} {
    %c0 = arith.constant 0 : index
    %c0_0 = arith.constant 0 : index
    %0 = vector.load %arg1[%c0, %c0_0] : memref<5x16xf32, #tpu.memory_space<vmem>>, vector<5x16xf32>
    %c0_1 = arith.constant 0 : index
    %c0_2 = arith.constant 0 : index
    %1 = vector.load %arg2[%c0_1, %c0_2] : memref<8x16xf32, #tpu.memory_space<vmem>>, vector<8x16xf32>
    %2 = vector.extract_strided_slice %0 {offsets = [0, 0], sizes = [1, 16], strides = [1, 1]} : vector<5x16xf32> to vector<1x16xf32>
    %3 = vector.broadcast %2 : vector<1x16xf32> to vector<8x16xf32>
    %4 = arith.mulf %3, %1 : vector<8x16xf32>
    %5 = vector.extract_strided_slice %0 {offsets = [1, 0], sizes = [1, 16], strides = [1, 1]} : vector<5x16xf32> to vector<1x16xf32>
    %6 = vector.broadcast %5 : vector<1x16xf32> to vector<8x16xf32>
    %7 = arith.mulf %6, %1 : vector<8x16xf32>
    %8 = vector.extract_strided_slice %0 {offsets = [2, 0], sizes = [1, 16], strides = [1, 1]} : vector<5x16xf32> to vector<1x16xf32>
    %9 = vector.broadcast %8 : vector<1x16xf32> to vector<8x16xf32>
    %10 = arith.mulf %9, %1 : vector<8x16xf32>
    %11 = vector.extract_strided_slice %0 {offsets = [3, 0], sizes = [1, 16], strides = [1, 1]} : vector<5x16xf32> to vector<1x16xf32>
    %12 = vector.broadcast %11 : vector<1x16xf32> to vector<8x16xf32>
    %13 = arith.mulf %12, %1 : vector<8x16xf32>
    %14 = vector.extract_strided_slice %0 {offsets = [4, 0], sizes = [1, 16], strides = [1, 1]} : vector<5x16xf32> to vector<1x16xf32>
    %15 = vector.broadcast %14 : vector<1x16xf32> to vector<8x16xf32>
    %16 = arith.mulf %15, %1 : vector<8x16xf32>
    %17 = tpu.concatenate %4, %7, %10, %13, %16 in 0 : vector<8x16xf32>, vector<8x16xf32>, vector<8x16xf32>, vector<8x16xf32>, vector<8x16xf32> -> vector<40x16xf32>
    %c0_3 = arith.constant 0 : index
    %c0_4 = arith.constant 0 : index
    %18 = vector.load %arg3[%c0_3, %c0_4] : memref<7x40xf32, #tpu.memory_space<vmem>>, vector<7x40xf32>
    %cst = arith.constant dense<0.000000e+00> : vector<7x16xf32>
    %19 = tpu.matmul %18, %17, %cst {dimension_numbers = #tpu.dot_dimension_numbers<[1], [0], [0], [1], [0, 0, 1, 1], [], []>} : vector<7x40xf32>, vector<40x16xf32>, vector<7x16xf32> -> vector<7x16xf32>
    %c0_5 = arith.constant 0 : index
    %c0_6 = arith.constant 0 : index
    %20 = vector.load %arg4[%c0_5, %c0_6] : memref<7x16xf32, #tpu.memory_space<vmem>>, vector<7x16xf32>
    tpu.vector_store %arg4[%c0_5, %c0_6], %19 {strides = array<i32>} : memref<7x16xf32, #tpu.memory_space<vmem>>, vector<7x16xf32>,
    return
  }
  func.func @transform_0(%arg0: i32) -> (i32, i32) {
    %c0_i32 = arith.constant 0 : i32
    %c0_i32_0 = arith.constant 0 : i32
    return %c0_i32, %arg0 : i32, i32
  }
  func.func @transform_1(%arg0: i32) -> (i32, i32) {
    %c0_i32 = arith.constant 0 : i32
    %c0_i32_0 = arith.constant 0 : i32
    return %c0_i32, %arg0 : i32, i32
  }
  func.func @transform_2(%arg0: i32) -> (i32, i32) {
    %c0_i32 = arith.constant 0 : i32
    %c0_i32_0 = arith.constant 0 : i32
    %c0_i32_1 = arith.constant 0 : i32
    return %c0_i32, %c0_i32_0 : i32, i32
  }
  func.func @transform_3(%arg0: i32) -> (i32, i32) {
    %c0_i32 = arith.constant 0 : i32
    %c0_i32_0 = arith.constant 0 : i32
    return %c0_i32, %arg0 : i32, i32
  }
}

</mosaic_0001>

<llo_original>
// kernel: tpu_custom_call.1
$region0: #{tpu_custom_call.1}
  #allocation0 [shape = 'u32[]', space=smem, size = 0x4, offset = 0x4, fixed_abs, tag = 'smem constant byte address 0x4 - core index']
  #allocation1 [shape = 'u32[144,128]{1,0:T(1,128)}', space=vmem, size = 0x12000, scoped, tag = 'internal scratch']
  %s0 = inlined_call_operand.hbm [shape: f32[5,16], index: 0, kind: input, shape index: {}]
  %s1 = inlined_call_operand.hbm [shape: f32[8,16], index: 1, kind: input, shape index: {}]
  %s2 = inlined_call_operand.hbm [shape: f32[7,40], index: 2, kind: input, shape index: {}]
  %s3 = inlined_call_operand.hbm [shape: f32[7,16], index: 3, kind: output, shape index: {}]
  %s4 = sld [smem:[#allocation0]]
  $region34: #{tpu_custom_call.1} parent=0
    _
  %s6 = ssub.s32 1, %s4
  %s7 = scalar_select 0, %s6, %s4
  $region1: #{tpu_custom_call.1} parent=0
    #allocation2 [shape = 'u8[4096]{0}', space=vmem, size = 0x1000, scoped, tag = 'input window, operand 0, single buffered']
    #allocation3 [shape = 's32[1]{0}', space=sflag, size = 0x4, scoped, tag = 'scoped memory for tpu_custom_call.1']
    #allocation4 [shape = 's32[1]{0}', space=sflag, size = 0x4, scoped, tag = 'scoped memory for tpu_custom_call.1']
    #allocation5 [shape = 'u8[4096]{0}', space=vmem, size = 0x1000, scoped, tag = 'input window, operand 1, single buffered']
    #allocation6 [shape = 's32[1]{0}', space=sflag, size = 0x4, scoped, tag = 'scoped memory for tpu_custom_call.1']
    #allocation7 [shape = 'u8[4096]{0}', space=vmem, size = 0x1000, scoped, tag = 'input window, operand 2, single buffered']
    #allocation8 [shape = 'u8[4096]{0}', space=vmem, size = 0x1000, scoped, tag = 'output window, operand 0, single buffered']
    %8 = vsyncpa [#allocation3], 0
    %9 = vsyncpa [#allocation6], 0
    %10 = vsyncpa [#allocation4], 0
    // Predicated region
    $region2: #{tpu_custom_call.1} parent=1 // pred_check
      _
    $region3: #{tpu_custom_call.1} parent=1 // pred_check_branch
      %12 = sbr.rel (0) target = $region5
    $region4: #{tpu_custom_call.1} parent=1 // pred_region
      %s14 = ssub.s32 128, 128
      %15 = vsyncadd [#allocation3], %s14
      %s17 = sshll.u32 [#allocation2], 4
      %s18 = int_to_ptr.vmem [resolvable:$true] %s17
      %20 = dma.hbm_to_vmem [thread:$0]  %s0, 128, %s18, [#allocation3]
    $region5: #{tpu_custom_call.1} parent=1 // pred_fallthru
      _
    // Predicated region
    $region6: #{tpu_custom_call.1} parent=1 // pred_check
      _
    $region7: #{tpu_custom_call.1} parent=1 // pred_check_branch
      %22 = sbr.rel (0) target = $region9
    $region8: #{tpu_custom_call.1} parent=1 // pred_region
      %s24 = ssub.s32 128, 128
      %25 = vsyncadd [#allocation6], %s24
      %s27 = sshll.u32 [#allocation5], 4
      %s28 = int_to_ptr.vmem [resolvable:$true] %s27
      %30 = dma.hbm_to_vmem [thread:$0]  %s1, 128, %s28, [#allocation6]
    $region9: #{tpu_custom_call.1} parent=1 // pred_fallthru
      _
    // Predicated region
    $region10: #{tpu_custom_call.1} parent=1 // pred_check
      _
    $region11: #{tpu_custom_call.1} parent=1 // pred_check_branch
      %32 = sbr.rel (0) target = $region13
    $region12: #{tpu_custom_call.1} parent=1 // pred_region
      %s34 = ssub.s32 128, 128
      %35 = vsyncadd [#allocation6], %s34
      %s37 = sshll.u32 [#allocation7], 4
      %s38 = int_to_ptr.vmem [resolvable:$true] %s37
      %40 = dma.hbm_to_vmem [thread:$0]  %s2, 128, %s38, [#allocation6]
    $region13: #{tpu_custom_call.1} parent=1 // pred_fallthru
      _
    // Predicated region
    $region14: #{tpu_custom_call.1} parent=1 // pred_check
      _
    $region15: #{tpu_custom_call.1} parent=1 // pred_check_branch
      %42 = sbr.rel (0) target = $region17
    $region16: #{tpu_custom_call.1} parent=1 // pred_region
      %43 = dma.done [#allocation3], 128
    $region17: #{tpu_custom_call.1} parent=1 // pred_fallthru
      _
    // Predicated region
    $region18: #{tpu_custom_call.1} parent=1 // pred_check
      _
    $region19: #{tpu_custom_call.1} parent=1 // pred_check_branch
      %45 = sbr.rel (0) target = $region21
    $region20: #{tpu_custom_call.1} parent=1 // pred_region
      %46 = dma.done [#allocation6], 128
    $region21: #{tpu_custom_call.1} parent=1 // pred_fallthru
      _
    // Predicated region
    $region22: #{tpu_custom_call.1} parent=1 // pred_check
      _
    $region23: #{tpu_custom_call.1} parent=1 // pred_check_branch
      %48 = sbr.rel (0) target = $region25
    $region24: #{tpu_custom_call.1} parent=1 // pred_region
      %49 = dma.done [#allocation6], 128
    $region25: #{tpu_custom_call.1} parent=1 // pred_fallthru
      _
    %v50 = vld [vmem:[#allocation2] sm:$0x1f]
    %v51 = vld [vmem:[#allocation5] sm:$0xff]
    %v52 = vlaneseq
    %v53 = vshrl.u32 %v52, 7
    %v54 = vsub.s32 0, %v53
    %v55 = vrot.slane %v50, %v54
    %v56 = vmul.f32 %v55, %v51
    %v57 = vlaneseq
    %v58 = vshrl.u32 %v57, 7
    %v59 = vsub.s32 1, %v58
    %v60 = vrot.slane %v50, %v59
    %v61 = vmul.f32 %v60, %v51
    %v62 = vlaneseq
    %v63 = vshrl.u32 %v62, 7
    %v64 = vsub.s32 2, %v63
    %v65 = vrot.slane %v50, %v64
    %v66 = vmul.f32 %v65, %v51
    %v67 = vlaneseq
    %v68 = vshrl.u32 %v67, 7
    %v69 = vsub.s32 3, %v68
    %v70 = vrot.slane %v50, %v69
    %v71 = vmul.f32 %v70, %v51
    %v72 = vlaneseq
    %v73 = vshrl.u32 %v72, 7
    %v74 = vsub.s32 4, %v73
    %v75 = vrot.slane %v50, %v74
    %v76 = vmul.f32 %v75, %v51
    %v77 = vld [vmem:[#allocation7] sm:$0x7f]
    %vm78 = vcmask 326656
    %v80 = vsel %vm78, %v77, 0
    %82 = vmatprep.subr.mxu0 0.0
    %83 = vmatpush1.msra.mxu0 %v56
    %84 = vmatprep.subr.mxu0 0.0
    %85 = vmatpush1.msra.mxu0 %v61
    %86 = vmatprep.subr.mxu0 0.0
    %87 = vmatpush1.msra.mxu0 %v66
    %88 = vmatprep.subr.mxu0 0.0
    %89 = vmatpush1.msra.mxu0 %v71
    %90 = vmatprep.subr.mxu0 0.0
    %91 = vmatpush1.msra.mxu0 %v76
    %92 = vmatprep.subr.mxu0 0.0
    %93 = vmatpush1.msra.mxu0 0.0
    %94 = vmatprep.subr.mxu0 0.0
    %95 = vmatpush1.msra.mxu0 0.0
    %96 = vmatprep.subr.mxu0 0.0
    %97 = vmatpush1.msra.mxu0 0.0
    %98 = vmatprep.subr.mxu0 0.0
    %99 = vmatpush1.msra.mxu0 0.0
    %100 = vmatprep.subr.mxu0 0.0
    %101 = vmatpush1.msra.mxu0 0.0
    %102 = vmatprep.subr.mxu0 0.0
    %103 = vmatpush1.msra.mxu0 0.0
    %104 = vmatprep.subr.mxu0 0.0
    %105 = vmatpush1.msra.mxu0 0.0
    %106 = vmatprep.subr.mxu0 0.0
    %107 = vmatpush1.msra.mxu0 0.0
    %108 = vmatprep.subr.mxu0 0.0
    %109 = vmatpush1.msra.mxu0 0.0
    %110 = vmatprep.subr.mxu0 0.0
    %111 = vmatpush1.msra.mxu0 0.0
    %112 = vmatprep.subr.mxu0 0.0
    %113 = vmatpush1.msra.mxu0 0.0
    %114 = vmatprep.subr.mxu0 0.0
    %115 = vmatpush1.msra.mxu0 0.0
    %116 = vmatprep.subr.mxu0 0.0
    %117 = vmatpush1.msra.mxu0 0.0
    %118 = vmatprep.subr.mxu0 0.0
    %119 = vmatpush1.msra.mxu0 0.0
    %120 = vmatprep.subr.mxu0 0.0
    %121 = vmatpush1.msra.mxu0 0.0
    %122 = vmatprep.subr.mxu0 0.0
    %123 = vmatpush1.msra.mxu0 0.0
    %124 = vmatprep.subr.mxu0 0.0
    %125 = vmatpush1.msra.mxu0 0.0
    %126 = vmatprep.subr.mxu0 0.0
    %127 = vmatpush1.msra.mxu0 0.0
    %128 = vmatprep.subr.mxu0 0.0
    %129 = vmatpush1.msra.mxu0 0.0
    %130 = vmatprep.subr.mxu0 0.0
    %131 = vmatpush1.msra.mxu0 0.0
    %132 = vmatprep.subr.mxu0 0.0
    %133 = vmatpush1.msra.mxu0 0.0
    %134 = vmatprep.subr.mxu0 0.0
    %135 = vmatpush1.msra.mxu0 0.0
    %136 = vmatprep.subr.mxu0 0.0
    %137 = vmatpush1.msra.mxu0 0.0
    %138 = vmatprep.subr.mxu0 0.0
    %139 = vmatpush1.msra.mxu0 0.0
    %140 = vmatprep.subr.mxu0 0.0
    %141 = vmatpush1.msra.mxu0 0.0
    %142 = vmatprep.subr.mxu0 0.0
    %143 = vmatpush1.msra.mxu0 0.0
    %144 = vmatprep.subr.mxu0 0.0
    %145 = vmatpush1.msra.mxu0 0.0
    %146 = vmatprep.mubr.f32.mxu0 0.0
    %147 = vmatmul.mubr.f32.gmra.mrb[0].mxu0 %v80
    %v148 = vpop.f32.mrb[0].mxu0
    %v149 = vadd.f32 0.0, %v148
    %v150 = vpop.f32.mrb[0].mxu0
    %151 = vdwg.mxu0
    %vm152 = vcmask 129024
    %153 = vst.msk [vmem:[#allocation8] sm:$0x7f] %vm152, %v149
    // Predicated region
    $region26: #{tpu_custom_call.1} parent=1 // pred_check
      _
    $region27: #{tpu_custom_call.1} parent=1 // pred_check_branch
      %155 = sbr.rel (0) target = $region29
    $region28: #{tpu_custom_call.1} parent=1 // pred_region
      %s157 = ssub.s32 128, 128
      %158 = vsyncadd [#allocation4], %s157
      %s160 = sshll.u32 [#allocation8], 4
      %s161 = int_to_ptr.vmem [resolvable:$true] %s160
      %163 = dma.vmem_to_hbm [thread:$0]  %s161, 128, %s3, [#allocation4]
    $region29: #{tpu_custom_call.1} parent=1 // pred_fallthru
      _
    // Predicated region
    $region30: #{tpu_custom_call.1} parent=1 // pred_check
      _
    $region31: #{tpu_custom_call.1} parent=1 // pred_check_branch
      %165 = sbr.rel (0) target = $region33
    $region32: #{tpu_custom_call.1} parent=1 // pred_region
      %166 = dma.done [#allocation4], 128
    $region33: #{tpu_custom_call.1} parent=1 // pred_fallthru
      _
    %167 = vsyncpa [#allocation3], 1
    %168 = vsyncpa [#allocation6], 1
    %169 = vsyncpa [#allocation4], 1

</llo_original>
